<compile_context>
chip_gen: v6e
topology: v6e:2x2x1
jax: 0.10.0
libtpu: 0.0.40
codegen_flags: <defaults>
</compile_context>

<pallas_src>
import functools

import jax
import jax.numpy as jnp
from jax.experimental import pallas as pl
from jax.experimental.pallas import tpu as pltpu


def _cdiv(a, b):
    return -(-a // b)


def _round_up(n, m):
    return _cdiv(n, m) * m


def _choose_batch_tiling(B, batch_tile):
    """Grid first, then tile: worst-case padded rows < 8 * grid."""
    grid = max(_cdiv(B, batch_tile), 1)
    # Prefer >= 2 grid steps so the "parallel" batch axis can be split across
    # v7x's two TensorCores (no-op on single-TC v5e/v6e); only when each step
    # still gets at least 8 real rows.
    if grid < 2 and B >= 16:
        grid = 2
    TB = _round_up(_cdiv(B, grid), 8)
    return TB, TB * grid, grid


def _inv_dyn_kernel(s_ref, ns_ref, pa_ref,
                    w1s_ref, w1n_ref, w1a_ref, b1_ref,
                    w2_ref, b2_ref, w3_ref, b3_ref,
                    out_ref, *, compute_dtype):
    f32 = jnp.float32

    # Softsign on state / next_state only; prev_action passes through exactly.
    s = s_ref[...].astype(f32)
    ns = ns_ref[...].astype(f32)
    s = s / (1.0 + jnp.abs(s))
    ns = ns / (1.0 + jnp.abs(ns))

    # Layer 1: concat([s, ns, pa]) @ W1 == s @ W1[:sd] + ns @ W1[sd:sd+nsd] + pa @ W1[sd+nsd:]
    h = jnp.dot(s.astype(compute_dtype), w1s_ref[...], preferred_element_type=f32)
    h += jnp.dot(ns.astype(compute_dtype), w1n_ref[...], preferred_element_type=f32)
    h += jnp.dot(pa_ref[...], w1a_ref[...], preferred_element_type=f32)
    h = jnp.maximum(h + b1_ref[...], 0.0)          # ReLU (Dropout = id in eval)

    # Layer 2.
    h = jnp.dot(h.astype(compute_dtype), w2_ref[...], preferred_element_type=f32)
    h = jnp.maximum(h + b2_ref[...], 0.0)          # ReLU (Dropout = id in eval)

    # Output layer + tanh.
    z = jnp.dot(h.astype(compute_dtype), w3_ref[...], preferred_element_type=f32)
    out_ref[...] = jnp.tanh(z + b3_ref[...])


def inverse_dynamics_forward(state, next_state, prev_action, params, *,
                             compute_dtype=jnp.float32, batch_tile=1024):
    """Eval-mode forward of InverseDynamicsNetwork (net_type='DNN')."""
    B = state.shape[0]
    sd = state.shape[1]
    nsd = next_state.shape[1]
    ad = prev_action.shape[1]
    hd = params["b1"].shape[-1]
    action_dim = params["b3"].shape[-1]
    assert params["w1"].shape[0] == sd + nsd + ad

    TB, Bp, grid = _choose_batch_tiling(B, batch_tile)

    # Activations: only batch-row padding (usually a no-op) + dtype for bf16 path.
    def prep(x):
        x = x.astype(compute_dtype)
        if Bp != B:
            x = jnp.pad(x, ((0, Bp - B), (0, 0)))
        return x

    s = prep(state)
    ns = prep(next_state)
    pa = prep(prev_action)

    # W1 row blocks matching the torch.cat([state, next_state, prev_action]) order
    # (split points follow the actual input widths, so n_history > 1 is handled).
    w1 = params["w1"]
    w1s = w1[:sd].astype(compute_dtype)
    w1n = w1[sd:sd + nsd].astype(compute_dtype)
    w1a = w1[sd + nsd:].astype(compute_dtype)
    w2 = params["w2"].astype(compute_dtype)
    w3 = params["w3"].astype(compute_dtype)
    b1 = params["b1"].reshape(1, hd).astype(jnp.float32)
    b2 = params["b2"].reshape(1, hd).astype(jnp.float32)
    b3 = params["b3"].reshape(1, action_dim).astype(jnp.float32)

    kernel = functools.partial(_inv_dyn_kernel, compute_dtype=compute_dtype)

    # Weights/biases: constant block index -> fetched once, VMEM-resident.
    const = lambda shape: pl.BlockSpec(shape, lambda i: (0, 0))
    batched = lambda cols: pl.BlockSpec((TB, cols), lambda i: (i, 0))

    out = pl.pallas_call(
        kernel,
        out_shape=jax.ShapeDtypeStruct((Bp, action_dim), jnp.float32),
        grid=(grid,),
        in_specs=[
            batched(sd), batched(nsd), batched(ad),        # activations, batch-tiled
            const((sd, hd)), const((nsd, hd)), const((ad, hd)), const((1, hd)),   # W1 blocks, b1
            const((hd, hd)), const((1, hd)),               # W2, b2
            const((hd, action_dim)), const((1, action_dim)),   # W3, b3
        ],
        out_specs=pl.BlockSpec((TB, action_dim), lambda i: (i, 0)),
        compiler_params=pltpu.CompilerParams(
            dimension_semantics=("parallel",),             # megacore / v7x 2-TC split
        ),
    )(s, ns, pa, w1s, w1n, w1a, b1, w2, b2, w3, b3)

    return out[:B]


def init_params(key, state_dim, action_dim, n_history, hidden_dim):
    """Deterministic init matching the DNN module's layer shapes ((in, out) layout)."""
    in_dim = (state_dim * 2 + action_dim) * n_history
    k1, k2, k3, k4, k5, k6 = jax.random.split(key, 6)
    scale = 0.1
    return {
        "w1": scale * jax.random.normal(k1, (in_dim, hidden_dim), jnp.float32),
        "b1": scale * jax.random.normal(k2, (1, hidden_dim), jnp.float32),
        "w2": scale * jax.random.normal(k3, (hidden_dim, hidden_dim), jnp.float32),
        "b2": scale * jax.random.normal(k4, (1, hidden_dim), jnp.float32),
        "w3": scale * jax.random.normal(k5, (hidden_dim, action_dim), jnp.float32),
        "b3": scale * jax.random.normal(k6, (1, action_dim), jnp.float32),
    }


def _reference(state, next_state, prev_action, params):
    s = state / (1.0 + jnp.abs(state))
    ns = next_state / (1.0 + jnp.abs(next_state))
    z = jnp.concatenate([s, ns, prev_action], axis=1)
    z = jnp.maximum(z @ params["w1"] + params["b1"], 0.0)
    z = jnp.maximum(z @ params["w2"] + params["b2"], 0.0)
    return jnp.tanh(z @ params["w3"] + params["b3"])


if __name__ == "__main__":
    state_dim = 12
    action_dim = 8
    n_history = 1
    hidden_dim = 32
    batch = 8

    key = jax.random.PRNGKey(0)
    kp, ks, kn, ka = jax.random.split(key, 4)
    params = init_params(kp, state_dim, action_dim, n_history, hidden_dim)

    state = jax.random.normal(ks, (batch, state_dim * n_history), jnp.float32)
    next_state = jax.random.normal(kn, (batch, state_dim * n_history), jnp.float32)
    prev_action = jax.random.normal(ka, (batch, action_dim * n_history), jnp.float32)

    ref = _reference(state, next_state, prev_action, params)

    # Exact f32-operand path: tight tolerance vs. the f32 reference.
    out_f32 = inverse_dynamics_forward(state, next_state, prev_action, params,
                                       compute_dtype=jnp.float32)
    out_f32 = jax.block_until_ready(out_f32)
    assert out_f32.shape == (batch, action_dim)
    assert jnp.allclose(out_f32, ref, atol=1e-5, rtol=1e-5)

    # bf16-operand path (bf16 HBM activations/weights, f32 MXU accumulation).
    out_bf16 = inverse_dynamics_forward(state, next_state, prev_action, params,
                                        compute_dtype=jnp.bfloat16)
    out_bf16 = jax.block_until_ready(out_bf16)
    assert out_bf16.shape == (batch, action_dim)
    assert jnp.allclose(out_bf16, ref, atol=5e-2, rtol=5e-2)

    print("KERNEL_OK")
</pallas_src>

<mosaic_0001>
module attributes {stable_mosaic.version = 11 : i64} {
  func.func @_inv_dyn_kernel(%arg0: i32, %arg1: memref<8x12xf32, #tpu.memory_space<vmem>>, %arg2: memref<8x12xf32, #tpu.memory_space<vmem>>, %arg3: memref<8x8xf32, #tpu.memory_space<vmem>>, %arg4: memref<12x32xf32, #tpu.memory_space<vmem>>, %arg5: memref<12x32xf32, #tpu.memory_space<vmem>>, %arg6: memref<8x32xf32, #tpu.memory_space<vmem>>, %arg7: memref<1x32xf32, #tpu.memory_space<vmem>>, %arg8: memref<32x32xf32, #tpu.memory_space<vmem>>, %arg9: memref<1x32xf32, #tpu.memory_space<vmem>>, %arg10: memref<32x8xf32, #tpu.memory_space<vmem>>, %arg11: memref<1x8xf32, #tpu.memory_space<vmem>>, %arg12: memref<8x8xf32, #tpu.memory_space<vmem>>) attributes {dimension_semantics = [#tpu.dimension_semantics<parallel>], iteration_bounds = array<i64: 1>, scalar_prefetch = 0 : i64, scratch_operands = 0 : i64, tpu.core_type = #tpu.core_type<tc>, window_params = [{transform_indices = @transform_0, window_bounds = array<i64: 8, 12>}, {transform_indices = @transform_1, window_bounds = array<i64: 8, 12>}, {transform_indices = @transform_2, window_bounds = array<i64: 8, 8>}, {pipeline_mode = #tpu.pipeline_mode<synchronous>, transform_indices = @transform_3, window_bounds = array<i64: 12, 32>}, {pipeline_mode = #tpu.pipeline_mode<synchronous>, transform_indices = @transform_4, window_bounds = array<i64: 12, 32>}, {pipeline_mode = #tpu.pipeline_mode<synchronous>, transform_indices = @transform_5, window_bounds = array<i64: 8, 32>}, {pipeline_mode = #tpu.pipeline_mode<synchronous>, transform_indices = @transform_6, window_bounds = array<i64: 1, 32>}, {pipeline_mode = #tpu.pipeline_mode<synchronous>, transform_indices = @transform_7, window_bounds = array<i64: 32, 32>}, {pipeline_mode = #tpu.pipeline_mode<synchronous>, transform_indices = @transform_8, window_bounds = array<i64: 1, 32>}, {pipeline_mode = #tpu.pipeline_mode<synchronous>, transform_indices = @transform_9, window_bounds = array<i64: 32, 8>}, {pipeline_mode = #tpu.pipeline_mode<synchronous>, transform_indices = @transform_10, window_bounds = array<i64: 1, 8>}, {transform_indices = @transform_11, window_bounds = array<i64: 8, 8>}]} {
    %c0 = arith.constant 0 : index
    %c0_0 = arith.constant 0 : index
    %0 = vector.load %arg1[%c0, %c0_0] : memref<8x12xf32, #tpu.memory_space<vmem>>, vector<8x12xf32>
    %c0_1 = arith.constant 0 : index
    %c0_2 = arith.constant 0 : index
    %1 = vector.load %arg2[%c0_1, %c0_2] : memref<8x12xf32, #tpu.memory_space<vmem>>, vector<8x12xf32>
    %2 = math.absf %0 : vector<8x12xf32>
    %cst = arith.constant 1.000000e+00 : f32
    %3 = vector.broadcast %cst : f32 to vector<8x12xf32>
    %4 = arith.addf %3, %2 : vector<8x12xf32>
    %5 = arith.divf %0, %4 : vector<8x12xf32>
    %6 = math.absf %1 : vector<8x12xf32>
    %cst_3 = arith.constant 1.000000e+00 : f32
    %7 = vector.broadcast %cst_3 : f32 to vector<8x12xf32>
    %8 = arith.addf %7, %6 : vector<8x12xf32>
    %9 = arith.divf %1, %8 : vector<8x12xf32>
    %c0_4 = arith.constant 0 : index
    %c0_5 = arith.constant 0 : index
    %10 = vector.load %arg4[%c0_4, %c0_5] : memref<12x32xf32, #tpu.memory_space<vmem>>, vector<12x32xf32>
    %cst_6 = arith.constant dense<0.000000e+00> : vector<8x32xf32>
    %11 = tpu.matmul %5, %10, %cst_6 {dimension_numbers = #tpu.dot_dimension_numbers<[1], [0], [0], [1], [0, 0, 1, 1], [], []>} : vector<8x12xf32>, vector<12x32xf32>, vector<8x32xf32> -> vector<8x32xf32>
    %c0_7 = arith.constant 0 : index
    %c0_8 = arith.constant 0 : index
    %12 = vector.load %arg5[%c0_7, %c0_8] : memref<12x32xf32, #tpu.memory_space<vmem>>, vector<12x32xf32>
    %cst_9 = arith.constant dense<0.000000e+00> : vector<8x32xf32>
    %13 = tpu.matmul %9, %12, %cst_9 {dimension_numbers = #tpu.dot_dimension_numbers<[1], [0], [0], [1], [0, 0, 1, 1], [], []>} : vector<8x12xf32>, vector<12x32xf32>, vector<8x32xf32> -> vector<8x32xf32>
    %14 = arith.addf %11, %13 : vector<8x32xf32>
    %c0_10 = arith.constant 0 : index
    %c0_11 = arith.constant 0 : index
    %15 = vector.load %arg3[%c0_10, %c0_11] : memref<8x8xf32, #tpu.memory_space<vmem>>, vector<8x8xf32>
    %c0_12 = arith.constant 0 : index
    %c0_13 = arith.constant 0 : index
    %16 = vector.load %arg6[%c0_12, %c0_13] : memref<8x32xf32, #tpu.memory_space<vmem>>, vector<8x32xf32>
    %cst_14 = arith.constant dense<0.000000e+00> : vector<8x32xf32>
    %17 = tpu.matmul %15, %16, %cst_14 {dimension_numbers = #tpu.dot_dimension_numbers<[1], [0], [0], [1], [0, 0, 1, 1], [], []>} : vector<8x8xf32>, vector<8x32xf32>, vector<8x32xf32> -> vector<8x32xf32>
    %18 = arith.addf %14, %17 : vector<8x32xf32>
    %c0_15 = arith.constant 0 : index
    %c0_16 = arith.constant 0 : index
    %19 = vector.load %arg7[%c0_15, %c0_16] : memref<1x32xf32, #tpu.memory_space<vmem>>, vector<1x32xf32>
    %20 = vector.broadcast %19 : vector<1x32xf32> to vector<8x32xf32>
    %21 = arith.addf %18, %20 : vector<8x32xf32>
    %cst_17 = arith.constant 0.000000e+00 : f32
    %22 = vector.broadcast %cst_17 : f32 to vector<8x32xf32>
    %23 = arith.maximumf %21, %22 : vector<8x32xf32>
    %c0_18 = arith.constant 0 : index
    %c0_19 = arith.constant 0 : index
    %24 = vector.load %arg8[%c0_18, %c0_19] : memref<32x32xf32, #tpu.memory_space<vmem>>, vector<32x32xf32>
    %cst_20 = arith.constant dense<0.000000e+00> : vector<8x32xf32>
    %25 = tpu.matmul %23, %24, %cst_20 {dimension_numbers = #tpu.dot_dimension_numbers<[1], [0], [0], [1], [0, 0, 1, 1], [], []>} : vector<8x32xf32>, vector<32x32xf32>, vector<8x32xf32> -> vector<8x32xf32>
    %c0_21 = arith.constant 0 : index
    %c0_22 = arith.constant 0 : index
    %26 = vector.load %arg9[%c0_21, %c0_22] : memref<1x32xf32, #tpu.memory_space<vmem>>, vector<1x32xf32>
    %27 = vector.broadcast %26 : vector<1x32xf32> to vector<8x32xf32>
    %28 = arith.addf %25, %27 : vector<8x32xf32>
    %cst_23 = arith.constant 0.000000e+00 : f32
    %29 = vector.broadcast %cst_23 : f32 to vector<8x32xf32>
    %30 = arith.maximumf %28, %29 : vector<8x32xf32>
    %c0_24 = arith.constant 0 : index
    %c0_25 = arith.constant 0 : index
    %31 = vector.load %arg10[%c0_24, %c0_25] : memref<32x8xf32, #tpu.memory_space<vmem>>, vector<32x8xf32>
    %cst_26 = arith.constant dense<0.000000e+00> : vector<8x8xf32>
    %32 = tpu.matmul %30, %31, %cst_26 {dimension_numbers = #tpu.dot_dimension_numbers<[1], [0], [0], [1], [0, 0, 1, 1], [], []>} : vector<8x32xf32>, vector<32x8xf32>, vector<8x8xf32> -> vector<8x8xf32>
    %c0_27 = arith.constant 0 : index
    %c0_28 = arith.constant 0 : index
    %33 = vector.load %arg11[%c0_27, %c0_28] : memref<1x8xf32, #tpu.memory_space<vmem>>, vector<1x8xf32>
    %34 = vector.broadcast %33 : vector<1x8xf32> to vector<8x8xf32>
    %35 = arith.addf %32, %34 : vector<8x8xf32>
    %36 = math.tanh %35 : vector<8x8xf32>
    %c0_29 = arith.constant 0 : index
    %c0_30 = arith.constant 0 : index
    %37 = vector.load %arg12[%c0_29, %c0_30] : memref<8x8xf32, #tpu.memory_space<vmem>>, vector<8x8xf32>
    tpu.vector_store %arg12[%c0_29, %c0_30], %36 {strides = array<i32>} : memref<8x8xf32, #tpu.memory_space<vmem>>, vector<8x8xf32>,
    return
  }
  func.func @transform_0(%arg0: i32) -> (i32, i32) {
    %c0_i32 = arith.constant 0 : i32
    %c0_i32_0 = arith.constant 0 : i32
    return %arg0, %c0_i32 : i32, i32
  }
  func.func @transform_1(%arg0: i32) -> (i32, i32) {
    %c0_i32 = arith.constant 0 : i32
    %c0_i32_0 = arith.constant 0 : i32
    return %arg0, %c0_i32 : i32, i32
  }
  func.func @transform_2(%arg0: i32) -> (i32, i32) {
    %c0_i32 = arith.constant 0 : i32
    %c0_i32_0 = arith.constant 0 : i32
    return %arg0, %c0_i32 : i32, i32
  }
  func.func @transform_3(%arg0: i32) -> (i32, i32) {
    %c0_i32 = arith.constant 0 : i32
    %c0_i32_0 = arith.constant 0 : i32
    %c0_i32_1 = arith.constant 0 : i32
    return %c0_i32, %c0_i32_0 : i32, i32
  }
  func.func @transform_4(%arg0: i32) -> (i32, i32) {
    %c0_i32 = arith.constant 0 : i32
    %c0_i32_0 = arith.constant 0 : i32
    %c0_i32_1 = arith.constant 0 : i32
    return %c0_i32, %c0_i32_0 : i32, i32
  }
  func.func @transform_5(%arg0: i32) -> (i32, i32) {
    %c0_i32 = arith.constant 0 : i32
    %c0_i32_0 = arith.constant 0 : i32
    %c0_i32_1 = arith.constant 0 : i32
    return %c0_i32, %c0_i32_0 : i32, i32
  }
  func.func @transform_6(%arg0: i32) -> (i32, i32) {
    %c0_i32 = arith.constant 0 : i32
    %c0_i32_0 = arith.constant 0 : i32
    %c0_i32_1 = arith.constant 0 : i32
    return %c0_i32, %c0_i32_0 : i32, i32
  }
  func.func @transform_7(%arg0: i32) -> (i32, i32) {
    %c0_i32 = arith.constant 0 : i32
    %c0_i32_0 = arith.constant 0 : i32
    %c0_i32_1 = arith.constant 0 : i32
    return %c0_i32, %c0_i32_0 : i32, i32
  }
  func.func @transform_8(%arg0: i32) -> (i32, i32) {
    %c0_i32 = arith.constant 0 : i32
    %c0_i32_0 = arith.constant 0 : i32
    %c0_i32_1 = arith.constant 0 : i32
    return %c0_i32, %c0_i32_0 : i32, i32
  }
  func.func @transform_9(%arg0: i32) -> (i32, i32) {
    %c0_i32 = arith.constant 0 : i32
    %c0_i32_0 = arith.constant 0 : i32
    %c0_i32_1 = arith.constant 0 : i32
    return %c0_i32, %c0_i32_0 : i32, i32
  }
  func.func @transform_10(%arg0: i32) -> (i32, i32) {
    %c0_i32 = arith.constant 0 : i32
    %c0_i32_0 = arith.constant 0 : i32
    %c0_i32_1 = arith.constant 0 : i32
    return %c0_i32, %c0_i32_0 : i32, i32
  }
  func.func @transform_11(%arg0: i32) -> (i32, i32) {
    %c0_i32 = arith.constant 0 : i32
    %c0_i32_0 = arith.constant 0 : i32
    return %arg0, %c0_i32 : i32, i32
  }
}

</mosaic_0001>

<llo_original>
// kernel: tpu_custom_call.1
$region0: #{tpu_custom_call.1}
  #allocation0 [shape = 'u32[]', space=smem, size = 0x4, offset = 0x4, fixed_abs, tag = 'smem constant byte address 0x4 - core index']
  #allocation1 [shape = 'u32[144,128]{1,0:T(1,128)}', space=vmem, size = 0x12000, scoped, tag = 'internal scratch']
  %s0 = inlined_call_operand.hbm [shape: f32[8,12], index: 0, kind: input, shape index: {}]
  %s1 = inlined_call_operand.hbm [shape: f32[8,12], index: 1, kind: input, shape index: {}]
  %s2 = inlined_call_operand.hbm [shape: f32[8,8], index: 2, kind: input, shape index: {}]
  %s3 = inlined_call_operand.vmem [shape: f32[12,32], index: 3, kind: input, shape index: {}]
  %s4 = inlined_call_operand.hbm [shape: f32[12,32], index: 4, kind: input, shape index: {}]
  %s5 = inlined_call_operand.hbm [shape: f32[8,32], index: 5, kind: input, shape index: {}]
  %s6 = inlined_call_operand.hbm [shape: f32[1,32], index: 6, kind: input, shape index: {}]
  %s7 = inlined_call_operand.vmem [shape: f32[32,32], index: 7, kind: input, shape index: {}]
  %s8 = inlined_call_operand.hbm [shape: f32[1,32], index: 8, kind: input, shape index: {}]
  %s9 = inlined_call_operand.vmem [shape: f32[32,8], index: 9, kind: input, shape index: {}]
  %s10 = inlined_call_operand.vmem [shape: f32[1,8], index: 10, kind: input, shape index: {}]
  %s11 = inlined_call_operand.hbm [shape: f32[8,8], index: 11, kind: output, shape index: {}]
  %s12 = sld [smem:[#allocation0]]
  $region82: #{tpu_custom_call.1} parent=0
    _
  %s14 = ssub.s32 1, %s12
  %s15 = scalar_select 0, %s14, %s12
  $region1: #{tpu_custom_call.1} parent=0
    #allocation2 [shape = 'u8[4096]{0}', space=vmem, size = 0x1000, scoped, tag = 'input window, operand 0, single buffered']
    #allocation3 [shape = 's32[1]{0}', space=sflag, size = 0x4, scoped, tag = 'scoped memory for tpu_custom_call.1']
    #allocation4 [shape = 's32[1]{0}', space=sflag, size = 0x4, scoped, tag = 'scoped memory for tpu_custom_call.1']
    #allocation5 [shape = 'u8[4096]{0}', space=vmem, size = 0x1000, scoped, tag = 'input window, operand 1, single buffered']
    #allocation6 [shape = 's32[1]{0}', space=sflag, size = 0x4, scoped, tag = 'scoped memory for tpu_custom_call.1']
    #allocation7 [shape = 'u8[4096]{0}', space=vmem, size = 0x1000, scoped, tag = 'input window, operand 2, single buffered']
    #allocation8 [shape = 'u8[8192]{0}', space=vmem, size = 0x2000, scoped, tag = 'input window, operand 4, single buffered']
    #allocation9 [shape = 's32[1]{0}', space=sflag, size = 0x4, scoped, tag = 'scoped memory for tpu_custom_call.1']
    #allocation10 [shape = 'u8[4096]{0}', space=vmem, size = 0x1000, scoped, tag = 'input window, operand 5, single buffered']
    #allocation11 [shape = 'u8[512]{0}', space=vmem, size = 0x400, scoped, tag = 'input window, operand 6, single buffered']
    #allocation12 [shape = 's32[1]{0}', space=sflag, size = 0x4, scoped, tag = 'scoped memory for tpu_custom_call.1']
    #allocation13 [shape = 'u8[512]{0}', space=vmem, size = 0x400, scoped, tag = 'input window, operand 8, single buffered']
    #allocation14 [shape = 'u8[4096]{0}', space=vmem, size = 0x1000, scoped, tag = 'output window, operand 0, single buffered']
    %16 = vsyncpa [#allocation3], 0
    %17 = vsyncpa [#allocation6], 0
    %18 = vsyncpa [#allocation9], 0
    %19 = vsyncpa [#allocation12], 0
    %20 = vsyncpa [#allocation4], 0
    // Predicated region
    $region2: #{tpu_custom_call.1} parent=1 // pred_check
      _
    $region3: #{tpu_custom_call.1} parent=1 // pred_check_branch
      %22 = sbr.rel (0) target = $region5
    $region4: #{tpu_custom_call.1} parent=1 // pred_region
      %s24 = ssub.s32 128, 128
      %25 = vsyncadd [#allocation3], %s24
      %s27 = sshll.u32 [#allocation2], 4
      %s28 = int_to_ptr.vmem [resolvable:$true] %s27
      %30 = dma.hbm_to_vmem [thread:$0]  %s0, 128, %s28, [#allocation3]
    $region5: #{tpu_custom_call.1} parent=1 // pred_fallthru
      _
    // Predicated region
    $region6: #{tpu_custom_call.1} parent=1 // pred_check
      _
    $region7: #{tpu_custom_call.1} parent=1 // pred_check_branch
      %32 = sbr.rel (0) target = $region9
    $region8: #{tpu_custom_call.1} parent=1 // pred_region
      %s34 = ssub.s32 128, 128
      %35 = vsyncadd [#allocation6], %s34
      %s37 = sshll.u32 [#allocation5], 4
      %s38 = int_to_ptr.vmem [resolvable:$true] %s37
      %40 = dma.hbm_to_vmem [thread:$0]  %s1, 128, %s38, [#allocation6]
    $region9: #{tpu_custom_call.1} parent=1 // pred_fallthru
      _
    // Predicated region
    $region10: #{tpu_custom_call.1} parent=1 // pred_check
      _
    $region11: #{tpu_custom_call.1} parent=1 // pred_check_branch
      %42 = sbr.rel (0) target = $region13
    $region12: #{tpu_custom_call.1} parent=1 // pred_region
      %s44 = ssub.s32 128, 128
      %45 = vsyncadd [#allocation6], %s44
      %s47 = sshll.u32 [#allocation7], 4
      %s48 = int_to_ptr.vmem [resolvable:$true] %s47
      %50 = dma.hbm_to_vmem [thread:$0]  %s2, 128, %s48, [#allocation6]
    $region13: #{tpu_custom_call.1} parent=1 // pred_fallthru
      _
    // Predicated region
    $region14: #{tpu_custom_call.1} parent=1 // pred_check
      _
    $region15: #{tpu_custom_call.1} parent=1 // pred_check_branch
      %52 = sbr.rel (0) target = $region17
    $region16: #{tpu_custom_call.1} parent=1 // pred_region
      _
    $region17: #{tpu_custom_call.1} parent=1 // pred_fallthru
      _
    // Predicated region
    $region18: #{tpu_custom_call.1} parent=1 // pred_check
      _
    $region19: #{tpu_custom_call.1} parent=1 // pred_check_branch
      %54 = sbr.rel (0) target = $region21
    $region20: #{tpu_custom_call.1} parent=1 // pred_region
      %s56 = ssub.s32 256, 256
      %57 = vsyncadd [#allocation9], %s56
      %s58 = sshll.u32 [#allocation8], 4
      %s59 = int_to_ptr.vmem [resolvable:$true] %s58
      %64 = dma.hbm_to_vmem [thread:$0]  %s4, 256, %s59, [#allocation9], 128, 128, 8
    $region21: #{tpu_custom_call.1} parent=1 // pred_fallthru
      _
    // Predicated region
    $region22: #{tpu_custom_call.1} parent=1 // pred_check
      _
    $region23: #{tpu_custom_call.1} parent=1 // pred_check_branch
      %66 = sbr.rel (0) target = $region25
    $region24: #{tpu_custom_call.1} parent=1 // pred_region
      %s68 = ssub.s32 128, 128
      %69 = vsyncadd [#allocation9], %s68
      %s71 = sshll.u32 [#allocation10], 4
      %s72 = int_to_ptr.vmem [resolvable:$true] %s71
      %74 = dma.hbm_to_vmem [thread:$0]  %s5, 128, %s72, [#allocation9]
    $region25: #{tpu_custom_call.1} parent=1 // pred_fallthru
      _
    // Predicated region
    $region26: #{tpu_custom_call.1} parent=1 // pred_check
      _
    $region27: #{tpu_custom_call.1} parent=1 // pred_check_branch
      %76 = sbr.rel (0) target = $region29
    $region28: #{tpu_custom_call.1} parent=1 // pred_region
      %s78 = ssub.s32 16, 16
      %79 = vsyncadd [#allocation12], %s78
      %s81 = sshll.u32 [#allocation11], 4
      %s82 = int_to_ptr.vmem [resolvable:$true] %s81
      %84 = dma.hbm_to_vmem [thread:$0]  %s6, 16, %s82, [#allocation12]
    $region29: #{tpu_custom_call.1} parent=1 // pred_fallthru
      _
    // Predicated region
    $region30: #{tpu_custom_call.1} parent=1 // pred_check
      _
    $region31: #{tpu_custom_call.1} parent=1 // pred_check_branch
      %86 = sbr.rel (0) target = $region33
    $region32: #{tpu_custom_call.1} parent=1 // pred_region
      _
    $region33: #{tpu_custom_call.1} parent=1 // pred_fallthru
      _
    // Predicated region
    $region34: #{tpu_custom_call.1} parent=1 // pred_check
      _
    $region35: #{tpu_custom_call.1} parent=1 // pred_check_branch
      %88 = sbr.rel (0) target = $region37
    $region36: #{tpu_custom_call.1} parent=1 // pred_region
      %s90 = ssub.s32 16, 16
      %91 = vsyncadd [#allocation12], %s90
      %s93 = sshll.u32 [#allocation13], 4
      %s94 = int_to_ptr.vmem [resolvable:$true] %s93
      %96 = dma.hbm_to_vmem [thread:$0]  %s8, 16, %s94, [#allocation12]
    $region37: #{tpu_custom_call.1} parent=1 // pred_fallthru
      _
    // Predicated region
    $region38: #{tpu_custom_call.1} parent=1 // pred_check
      _
    $region39: #{tpu_custom_call.1} parent=1 // pred_check_branch
      %98 = sbr.rel (0) target = $region41
    $region40: #{tpu_custom_call.1} parent=1 // pred_region
      _
    $region41: #{tpu_custom_call.1} parent=1 // pred_fallthru
      _
    // Predicated region
    $region42: #{tpu_custom_call.1} parent=1 // pred_check
      _
    $region43: #{tpu_custom_call.1} parent=1 // pred_check_branch
      %100 = sbr.rel (0) target = $region45
    $region44: #{tpu_custom_call.1} parent=1 // pred_region
      _
    $region45: #{tpu_custom_call.1} parent=1 // pred_fallthru
      _
    // Predicated region
    $region46: #{tpu_custom_call.1} parent=1 // pred_check
      _
    $region47: #{tpu_custom_call.1} parent=1 // pred_check_branch
      %102 = sbr.rel (0) target = $region49
    $region48: #{tpu_custom_call.1} parent=1 // pred_region
      %103 = dma.done [#allocation3], 128
    $region49: #{tpu_custom_call.1} parent=1 // pred_fallthru
      _
    // Predicated region
    $region50: #{tpu_custom_call.1} parent=1 // pred_check
      _
    $region51: #{tpu_custom_call.1} parent=1 // pred_check_branch
      %105 = sbr.rel (0) target = $region53
    $region52: #{tpu_custom_call.1} parent=1 // pred_region
      %106 = dma.done [#allocation6], 128
    $region53: #{tpu_custom_call.1} parent=1 // pred_fallthru
      _
    // Predicated region
    $region54: #{tpu_custom_call.1} parent=1 // pred_check
      _
    $region55: #{tpu_custom_call.1} parent=1 // pred_check_branch
      %108 = sbr.rel (0) target = $region57
    $region56: #{tpu_custom_call.1} parent=1 // pred_region
      %109 = dma.done [#allocation6], 128
    $region57: #{tpu_custom_call.1} parent=1 // pred_fallthru
      _
    // Predicated region
    $region58: #{tpu_custom_call.1} parent=1 // pred_check
      _
    $region59: #{tpu_custom_call.1} parent=1 // pred_check_branch
      %111 = sbr.rel (0) target = $region61
    $region60: #{tpu_custom_call.1} parent=1 // pred_region
      %112 = dma.done [#allocation9], 256
    $region61: #{tpu_custom_call.1} parent=1 // pred_fallthru
      _
    // Predicated region
    $region62: #{tpu_custom_call.1} parent=1 // pred_check
      _
    $region63: #{tpu_custom_call.1} parent=1 // pred_check_branch
      %114 = sbr.rel (0) target = $region65
    $region64: #{tpu_custom_call.1} parent=1 // pred_region
      %115 = dma.done [#allocation9], 128
    $region65: #{tpu_custom_call.1} parent=1 // pred_fallthru
      _
    // Predicated region
    $region66: #{tpu_custom_call.1} parent=1 // pred_check
      _
    $region67: #{tpu_custom_call.1} parent=1 // pred_check_branch
      %117 = sbr.rel (0) target = $region69
    $region68: #{tpu_custom_call.1} parent=1 // pred_region
      %118 = dma.done [#allocation12], 16
    $region69: #{tpu_custom_call.1} parent=1 // pred_fallthru
      _
    // Predicated region
    $region70: #{tpu_custom_call.1} parent=1 // pred_check
      _
    $region71: #{tpu_custom_call.1} parent=1 // pred_check_branch
      %120 = sbr.rel (0) target = $region73
    $region72: #{tpu_custom_call.1} parent=1 // pred_region
      %121 = dma.done [#allocation12], 16
    $region73: #{tpu_custom_call.1} parent=1 // pred_fallthru
      _
    %v122 = vld [vmem:[#allocation2] sm:$0xff]
    %v123 = vld [vmem:[#allocation5] sm:$0xff]
    %v124 = vand.u32 2147483647, %v122
    %v125 = vadd.f32 %v124, 1.0
    %v126 = vrcp.pop %v125
    %v127 = vmul.f32 %v122, %v126
    %v128 = vand.u32 2147483647, %v123
    %v129 = vadd.f32 %v128, 1.0
    %v130 = vrcp.pop %v129
    %v131 = vmul.f32 %v123, %v130
    %v132 = vld [vmem:[%s3] sm:$0xff]
    %v133 = vld [vmem:[%s3 + $0x8] sm:$0xf]
    %v134 = vld [vmem:[#allocation8] sm:$0xff]
    %v135 = vld [vmem:[#allocation8 + $0x8] sm:$0xf]
    %vm136 = vcmask 97280
    %v138 = vsel %vm136, %v131, 0
    %vm140 = vcmask 1043456
    %v142 = vsel %vm140, %v135, 0
    %144 = vmatprep.subr.mxu0 0.0
    %145 = vmatpush1.msra.mxu0 0.0
    %146 = vmatprep.subr.mxu0 0.0
    %147 = vmatpush1.msra.mxu0 0.0
    %148 = vmatprep.subr.mxu0 0.0
    %149 = vmatpush1.msra.mxu0 0.0
    %150 = vmatprep.subr.mxu0 0.0
    %151 = vmatpush1.msra.mxu0 0.0
    %152 = vmatprep.subr.mxu0 0.0
    %153 = vmatpush1.msra.mxu0 0.0
    %154 = vmatprep.subr.mxu0 0.0
    %155 = vmatpush1.msra.mxu0 0.0
    %156 = vmatprep.subr.mxu0 0.0
    %157 = vmatpush1.msra.mxu0 0.0
    %158 = vmatprep.subr.mxu0 0.0
    %159 = vmatpush1.msra.mxu0 0.0
    %160 = vmatprep.subr.mxu0 0.0
    %161 = vmatpush1.msra.mxu0 0.0
    %162 = vmatprep.subr.mxu0 0.0
    %163 = vmatpush1.msra.mxu0 0.0
    %164 = vmatprep.subr.mxu0 0.0
    %165 = vmatpush1.msra.mxu0 0.0
    %166 = vmatprep.subr.mxu0 0.0
    %167 = vmatpush1.msra.mxu0 0.0
    %168 = vmatprep.subr.mxu0 0.0
    %169 = vmatpush1.msra.mxu0 0.0
    %170 = vmatprep.subr.mxu0 0.0
    %171 = vmatpush1.msra.mxu0 0.0
    %172 = vmatprep.subr.mxu0 0.0
    %173 = vmatpush1.msra.mxu0 %v142
    %174 = vmatprep.subr.mxu0 0.0
    %175 = vmatpush1.msra.mxu0 %v134
    %176 = vmatprep.subr.mxu0 0.0
    %177 = vmatpush2.msra.mxu0 0.0
    %178 = vmatprep.subr.mxu0 0.0
    %179 = vmatpush2.msra.mxu0 0.0
    %180 = vmatprep.subr.mxu0 0.0
    %181 = vmatpush2.msra.mxu0 0.0
    %182 = vmatprep.subr.mxu0 0.0
    %183 = vmatpush2.msra.mxu0 0.0
    %184 = vmatprep.subr.mxu0 0.0
    %185 = vmatpush2.msra.mxu0 0.0
    %186 = vmatprep.subr.mxu0 0.0
    %187 = vmatpush2.msra.mxu0 0.0
    %188 = vmatprep.subr.mxu0 0.0
    %189 = vmatpush2.msra.mxu0 0.0
    %190 = vmatprep.subr.mxu0 0.0
    %191 = vmatpush2.msra.mxu0 0.0
    %192 = vmatprep.subr.mxu0 0.0
    %193 = vmatpush2.msra.mxu0 0.0
    %194 = vmatprep.subr.mxu0 0.0
    %195 = vmatpush2.msra.mxu0 0.0
    %196 = vmatprep.subr.mxu0 0.0
    %197 = vmatpush2.msra.mxu0 0.0
    %198 = vmatprep.subr.mxu0 0.0
    %199 = vmatpush2.msra.mxu0 0.0
    %200 = vmatprep.subr.mxu0 0.0
    %201 = vmatpush2.msra.mxu0 0.0
    %202 = vmatprep.subr.mxu0 0.0
    %203 = vmatpush2.msra.mxu0 0.0
    %204 = vmatprep.subr.mxu0 0.0
    %205 = vmatpush2.msra.mxu0 0.0
    %206 = vmatprep.subr.mxu0 0.0
    %207 = vmatpush2.msra.mxu0 0.0
    %208 = vmatprep.mubr.f32.mxu0 0.0
    %209 = vmatmul.mubr.f32.gmra.mxu0 %v138
    %v210 = vpop.f32.mrf.mxu0
    %v211 = vadd.f32 0.0, %v210
    %v212 = vpop.f32.mrf.mxu0
    %213 = vdwg.mxu0
    %v215 = vsel %vm136, %v127, 0
    %v218 = vsel %vm140, %v133, 0
    %220 = vmatprep.subr.mxu0 0.0
    %221 = vmatpush1.msra.mxu0 0.0
    %222 = vmatprep.subr.mxu0 0.0
    %223 = vmatpush1.msra.mxu0 0.0
    %224 = vmatprep.subr.mxu0 0.0
    %225 = vmatpush1.msra.mxu0 0.0
    %226 = vmatprep.subr.mxu0 0.0
    %227 = vmatpush1.msra.mxu0 0.0
    %228 = vmatprep.subr.mxu0 0.0
    %229 = vmatpush1.msra.mxu0 0.0
    %230 = vmatprep.subr.mxu0 0.0
    %231 = vmatpush1.msra.mxu0 0.0
    %232 = vmatprep.subr.mxu0 0.0
    %233 = vmatpush1.msra.mxu0 0.0
    %234 = vmatprep.subr.mxu0 0.0
    %235 = vmatpush1.msra.mxu0 0.0
    %236 = vmatprep.subr.mxu0 0.0
    %237 = vmatpush1.msra.mxu0 0.0
    %238 = vmatprep.subr.mxu0 0.0
    %239 = vmatpush1.msra.mxu0 0.0
    %240 = vmatprep.subr.mxu0 0.0
    %241 = vmatpush1.msra.mxu0 0.0
    %242 = vmatprep.subr.mxu0 0.0
    %243 = vmatpush1.msra.mxu0 0.0
    %244 = vmatprep.subr.mxu0 0.0
    %245 = vmatpush1.msra.mxu0 0.0
    %246 = vmatprep.subr.mxu0 0.0
    %247 = vmatpush1.msra.mxu0 0.0
    %248 = vmatprep.subr.mxu0 0.0
    %249 = vmatpush1.msra.mxu0 %v218
    %250 = vmatprep.subr.mxu0 0.0
    %251 = vmatpush1.msra.mxu0 %v132
    %252 = vmatprep.subr.mxu0 0.0
    %253 = vmatpush2.msra.mxu0 0.0
    %254 = vmatprep.subr.mxu0 0.0
    %255 = vmatpush2.msra.mxu0 0.0
    %256 = vmatprep.subr.mxu0 0.0
    %257 = vmatpush2.msra.mxu0 0.0
    %258 = vmatprep.subr.mxu0 0.0
    %259 = vmatpush2.msra.mxu0 0.0
    %260 = vmatprep.subr.mxu0 0.0
    %261 = vmatpush2.msra.mxu0 0.0
    %262 = vmatprep.subr.mxu0 0.0
    %263 = vmatpush2.msra.mxu0 0.0
    %264 = vmatprep.subr.mxu0 0.0
    %265 = vmatpush2.msra.mxu0 0.0
    %266 = vmatprep.subr.mxu0 0.0
    %267 = vmatpush2.msra.mxu0 0.0
    %268 = vmatprep.subr.mxu0 0.0
    %269 = vmatpush2.msra.mxu0 0.0
    %270 = vmatprep.subr.mxu0 0.0
    %271 = vmatpush2.msra.mxu0 0.0
    %272 = vmatprep.subr.mxu0 0.0
    %273 = vmatpush2.msra.mxu0 0.0
    %274 = vmatprep.subr.mxu0 0.0
    %275 = vmatpush2.msra.mxu0 0.0
    %276 = vmatprep.subr.mxu0 0.0
    %277 = vmatpush2.msra.mxu0 0.0
    %278 = vmatprep.subr.mxu0 0.0
    %279 = vmatpush2.msra.mxu0 0.0
    %280 = vmatprep.subr.mxu0 0.0
    %281 = vmatpush2.msra.mxu0 0.0
    %282 = vmatprep.subr.mxu0 0.0
    %283 = vmatpush2.msra.mxu0 0.0
    %284 = vmatprep.mubr.f32.mxu0 0.0
    %285 = vmatmul.mubr.f32.gmra.mxu0 %v215
    %v286 = vpop.f32.mrf.mxu0
    %v287 = vadd.f32 %v211, %v286
    %v288 = vpop.f32.mrf.mxu0
    %289 = vdwg.mxu0
    %v290 = vld [vmem:[#allocation7] sm:$0xff]
    %v291 = vld [vmem:[#allocation10] sm:$0xff]
    %vm292 = vcmask 64512
    %v294 = vsel %vm292, %v290, 0
    %296 = vmatprep.subr.mxu0 0.0
    %297 = vmatpush1.msra.mxu0 0.0
    %298 = vmatprep.subr.mxu0 0.0
    %299 = vmatpush1.msra.mxu0 0.0
    %300 = vmatprep.subr.mxu0 0.0
    %301 = vmatpush1.msra.mxu0 0.0
    %302 = vmatprep.subr.mxu0 0.0
    %303 = vmatpush1.msra.mxu0 0.0
    %304 = vmatprep.subr.mxu0 0.0
    %305 = vmatpush1.msra.mxu0 0.0
    %306 = vmatprep.subr.mxu0 0.0
    %307 = vmatpush1.msra.mxu0 0.0
    %308 = vmatprep.subr.mxu0 0.0
    %309 = vmatpush1.msra.mxu0 0.0
    %310 = vmatprep.subr.mxu0 0.0
    %311 = vmatpush1.msra.mxu0 0.0
    %312 = vmatprep.subr.mxu0 0.0
    %313 = vmatpush1.msra.mxu0 0.0
    %314 = vmatprep.subr.mxu0 0.0
    %315 = vmatpush1.msra.mxu0 0.0
    %316 = vmatprep.subr.mxu0 0.0
    %317 = vmatpush1.msra.mxu0 0.0
    %318 = vmatprep.subr.mxu0 0.0
    %319 = vmatpush1.msra.mxu0 0.0
    %320 = vmatprep.subr.mxu0 0.0
    %321 = vmatpush1.msra.mxu0 0.0
    %322 = vmatprep.subr.mxu0 0.0
    %323 = vmatpush1.msra.mxu0 0.0
    %324 = vmatprep.subr.mxu0 0.0
    %325 = vmatpush1.msra.mxu0 0.0
    %326 = vmatprep.subr.mxu0 0.0
    %327 = vmatpush1.msra.mxu0 %v291
    %328 = vmatprep.subr.mxu0 0.0
    %329 = vmatpush2.msra.mxu0 0.0
    %330 = vmatprep.subr.mxu0 0.0
    %331 = vmatpush2.msra.mxu0 0.0
    %332 = vmatprep.subr.mxu0 0.0
    %333 = vmatpush2.msra.mxu0 0.0
    %334 = vmatprep.subr.mxu0 0.0
    %335 = vmatpush2.msra.mxu0 0.0
    %336 = vmatprep.subr.mxu0 0.0
    %337 = vmatpush2.msra.mxu0 0.0
    %338 = vmatprep.subr.mxu0 0.0
    %339 = vmatpush2.msra.mxu0 0.0
    %340 = vmatprep.subr.mxu0 0.0
    %341 = vmatpush2.msra.mxu0 0.0
    %342 = vmatprep.subr.mxu0 0.0
    %343 = vmatpush2.msra.mxu0 0.0
    %344 = vmatprep.subr.mxu0 0.0
    %345 = vmatpush2.msra.mxu0 0.0
    %346 = vmatprep.subr.mxu0 0.0
    %347 = vmatpush2.msra.mxu0 0.0
    %348 = vmatprep.subr.mxu0 0.0
    %349 = vmatpush2.msra.mxu0 0.0
    %350 = vmatprep.subr.mxu0 0.0
    %351 = vmatpush2.msra.mxu0 0.0
    %352 = vmatprep.subr.mxu0 0.0
    %353 = vmatpush2.msra.mxu0 0.0
    %354 = vmatprep.subr.mxu0 0.0
    %355 = vmatpush2.msra.mxu0 0.0
    %356 = vmatprep.subr.mxu0 0.0
    %357 = vmatpush2.msra.mxu0 0.0
    %358 = vmatprep.subr.mxu0 0.0
    %359 = vmatpush2.msra.mxu0 0.0
    %360 = vmatprep.mubr.f32.mxu0 0.0
    %361 = vmatmul.mubr.f32.gmra.mxu0 %v294
    %v362 = vpop.f32.mrf.mxu0
    %v363 = vadd.f32 0.0, %v362
    %v364 = vpop.f32.mrf.mxu0
    %365 = vdwg.mxu0
    %v366 = vadd.f32 %v287, %v363
    %v367 = vld [vmem:[#allocation11] sm:$0x1]
    %v369 = vlaneseq
    %v370 = vshrl.u32 %v369, 7
    %v371 = vsub.s32 0, %v370
    %v372 = vrot.slane %v367, %v371
    %v374 = vadd.f32 %v366, %v372
    %v375 = vmax.f32 %v374, 0.0
    %v376 = vld [vmem:[%s7] sm:$0xff]
    %v377 = vld [vmem:[%s7 + $0x8] sm:$0xff]
    %v378 = vld [vmem:[%s7 + $0x10] sm:$0xff]
    %v379 = vld [vmem:[%s7 + $0x18] sm:$0xff]
    %v380 = vld [vmem:[#allocation13] sm:$0x1]
    %v382 = vlaneseq
    %v383 = vshrl.u32 %v382, 7
    %v384 = vsub.s32 0, %v383
    %v385 = vrot.slane %v380, %v384
    %vm387 = vcmask 261120
    %v389 = vsel %vm387, %v375, 0
    %391 = vmatprep.subr.mxu0 0.0
    %392 = vmatpush1.msra.mxu0 0.0
    %393 = vmatprep.subr.mxu0 0.0
    %394 = vmatpush1.msra.mxu0 0.0
    %395 = vmatprep.subr.mxu0 0.0
    %396 = vmatpush1.msra.mxu0 0.0
    %397 = vmatprep.subr.mxu0 0.0
    %398 = vmatpush1.msra.mxu0 0.0
    %399 = vmatprep.subr.mxu0 0.0
    %400 = vmatpush1.msra.mxu0 0.0
    %401 = vmatprep.subr.mxu0 0.0
    %402 = vmatpush1.msra.mxu0 0.0
    %403 = vmatprep.subr.mxu0 0.0
    %404 = vmatpush1.msra.mxu0 0.0
    %405 = vmatprep.subr.mxu0 0.0
    %406 = vmatpush1.msra.mxu0 0.0
    %407 = vmatprep.subr.mxu0 0.0
    %408 = vmatpush1.msra.mxu0 0.0
    %409 = vmatprep.subr.mxu0 0.0
    %410 = vmatpush1.msra.mxu0 0.0
    %411 = vmatprep.subr.mxu0 0.0
    %412 = vmatpush1.msra.mxu0 0.0
    %413 = vmatprep.subr.mxu0 0.0
    %414 = vmatpush1.msra.mxu0 0.0
    %415 = vmatprep.subr.mxu0 0.0
    %416 = vmatpush1.msra.mxu0 %v379
    %417 = vmatprep.subr.mxu0 0.0
    %418 = vmatpush1.msra.mxu0 %v378
    %419 = vmatprep.subr.mxu0 0.0
    %420 = vmatpush1.msra.mxu0 %v377
    %421 = vmatprep.subr.mxu0 0.0
    %422 = vmatpush1.msra.mxu0 %v376
    %423 = vmatprep.subr.mxu0 0.0
    %424 = vmatpush2.msra.mxu0 0.0
    %425 = vmatprep.subr.mxu0 0.0
    %426 = vmatpush2.msra.mxu0 0.0
    %427 = vmatprep.subr.mxu0 0.0
    %428 = vmatpush2.msra.mxu0 0.0
    %429 = vmatprep.subr.mxu0 0.0
    %430 = vmatpush2.msra.mxu0 0.0
    %431 = vmatprep.subr.mxu0 0.0
    %432 = vmatpush2.msra.mxu0 0.0
    %433 = vmatprep.subr.mxu0 0.0
    %434 = vmatpush2.msra.mxu0 0.0
    %435 = vmatprep.subr.mxu0 0.0
    %436 = vmatpush2.msra.mxu0 0.0
    %437 = vmatprep.subr.mxu0 0.0
    %438 = vmatpush2.msra.mxu0 0.0
    %439 = vmatprep.subr.mxu0 0.0
    %440 = vmatpush2.msra.mxu0 0.0
    %441 = vmatprep.subr.mxu0 0.0
    %442 = vmatpush2.msra.mxu0 0.0
    %443 = vmatprep.subr.mxu0 0.0
    %444 = vmatpush2.msra.mxu0 0.0
    %445 = vmatprep.subr.mxu0 0.0
    %446 = vmatpush2.msra.mxu0 0.0
    %447 = vmatprep.subr.mxu0 0.0
    %448 = vmatpush2.msra.mxu0 0.0
    %449 = vmatprep.subr.mxu0 0.0
    %450 = vmatpush2.msra.mxu0 0.0
    %451 = vmatprep.subr.mxu0 0.0
    %452 = vmatpush2.msra.mxu0 0.0
    %453 = vmatprep.subr.mxu0 0.0
    %454 = vmatpush2.msra.mxu0 0.0
    %455 = vmatprep.mubr.f32.mxu0 0.0
    %456 = vmatmul.mubr.f32.gmra.mxu0 %v389
    %v457 = vpop.f32.mrf.mxu0
    %v458 = vadd.f32 %v385, %v457
    %v459 = vpop.f32.mrf.mxu0
    %460 = vdwg.mxu0
    %v461 = vmax.f32 %v458, 0.0
    %v462 = vld [vmem:[%s9] sm:$0xff]
    %v463 = vld [vmem:[%s9 + $0x8] sm:$0xff]
    %v464 = vld [vmem:[%s9 + $0x10] sm:$0xff]
    %v465 = vld [vmem:[%s9 + $0x18] sm:$0xff]
    %v466 = vld [vmem:[%s10] sm:$0x1]
    %v468 = vlaneseq
    %v469 = vshrl.u32 %v468, 7
    %v470 = vsub.s32 0, %v469
    %v471 = vrot.slane %v466, %v470
    %v474 = vsel %vm387, %v461, 0
    %476 = vmatprep.subr.mxu0 0.0
    %477 = vmatpush1.msra.mxu0 0.0
    %478 = vmatprep.subr.mxu0 0.0
    %479 = vmatpush1.msra.mxu0 0.0
    %480 = vmatprep.subr.mxu0 0.0
    %481 = vmatpush1.msra.mxu0 0.0
    %482 = vmatprep.subr.mxu0 0.0
    %483 = vmatpush1.msra.mxu0 0.0
    %484 = vmatprep.subr.mxu0 0.0
    %485 = vmatpush1.msra.mxu0 0.0
    %486 = vmatprep.subr.mxu0 0.0
    %487 = vmatpush1.msra.mxu0 0.0
    %488 = vmatprep.subr.mxu0 0.0
    %489 = vmatpush1.msra.mxu0 0.0
    %490 = vmatprep.subr.mxu0 0.0
    %491 = vmatpush1.msra.mxu0 0.0
    %492 = vmatprep.subr.mxu0 0.0
    %493 = vmatpush1.msra.mxu0 0.0
    %494 = vmatprep.subr.mxu0 0.0
    %495 = vmatpush1.msra.mxu0 0.0
    %496 = vmatprep.subr.mxu0 0.0
    %497 = vmatpush1.msra.mxu0 0.0
    %498 = vmatprep.subr.mxu0 0.0
    %499 = vmatpush1.msra.mxu0 0.0
    %500 = vmatprep.subr.mxu0 0.0
    %501 = vmatpush1.msra.mxu0 %v465
    %502 = vmatprep.subr.mxu0 0.0
    %503 = vmatpush1.msra.mxu0 %v464
    %504 = vmatprep.subr.mxu0 0.0
    %505 = vmatpush1.msra.mxu0 %v463
    %506 = vmatprep.subr.mxu0 0.0
    %507 = vmatpush1.msra.mxu0 %v462
    %508 = vmatprep.subr.mxu0 0.0
    %509 = vmatpush2.msra.mxu0 0.0
    %510 = vmatprep.subr.mxu0 0.0
    %511 = vmatpush2.msra.mxu0 0.0
    %512 = vmatprep.subr.mxu0 0.0
    %513 = vmatpush2.msra.mxu0 0.0
    %514 = vmatprep.subr.mxu0 0.0
    %515 = vmatpush2.msra.mxu0 0.0
    %516 = vmatprep.subr.mxu0 0.0
    %517 = vmatpush2.msra.mxu0 0.0
    %518 = vmatprep.subr.mxu0 0.0
    %519 = vmatpush2.msra.mxu0 0.0
    %520 = vmatprep.subr.mxu0 0.0
    %521 = vmatpush2.msra.mxu0 0.0
    %522 = vmatprep.subr.mxu0 0.0
    %523 = vmatpush2.msra.mxu0 0.0
    %524 = vmatprep.subr.mxu0 0.0
    %525 = vmatpush2.msra.mxu0 0.0
    %526 = vmatprep.subr.mxu0 0.0
    %527 = vmatpush2.msra.mxu0 0.0
    %528 = vmatprep.subr.mxu0 0.0
    %529 = vmatpush2.msra.mxu0 0.0
    %530 = vmatprep.subr.mxu0 0.0
    %531 = vmatpush2.msra.mxu0 0.0
    %532 = vmatprep.subr.mxu0 0.0
    %533 = vmatpush2.msra.mxu0 0.0
    %534 = vmatprep.subr.mxu0 0.0
    %535 = vmatpush2.msra.mxu0 0.0
    %536 = vmatprep.subr.mxu0 0.0
    %537 = vmatpush2.msra.mxu0 0.0
    %538 = vmatprep.subr.mxu0 0.0
    %539 = vmatpush2.msra.mxu0 0.0
    %540 = vmatprep.mubr.f32.mxu0 0.0
    %541 = vmatmul.mubr.f32.gmra.mxu0 %v474
    %v542 = vpop.f32.mrf.mxu0
    %v543 = vadd.f32 %v471, %v542
    %v544 = vpop.f32.mrf.mxu0
    %545 = vdwg.mxu0
    %v546 = vtanh.pop %v543
    %547 = vst.msk [vmem:[#allocation14] sm:$0xff] %vm292, %v546
    // Predicated region
    $region74: #{tpu_custom_call.1} parent=1 // pred_check
      _
    $region75: #{tpu_custom_call.1} parent=1 // pred_check_branch
      %549 = sbr.rel (0) target = $region77
    $region76: #{tpu_custom_call.1} parent=1 // pred_region
      %s551 = ssub.s32 128, 128
      %552 = vsyncadd [#allocation4], %s551
      %s554 = sshll.u32 [#allocation14], 4
      %s555 = int_to_ptr.vmem [resolvable:$true] %s554
      %557 = dma.vmem_to_hbm [thread:$0]  %s555, 128, %s11, [#allocation4]
    $region77: #{tpu_custom_call.1} parent=1 // pred_fallthru
      _
    // Predicated region
    $region78: #{tpu_custom_call.1} parent=1 // pred_check
      _
    $region79: #{tpu_custom_call.1} parent=1 // pred_check_branch
      %559 = sbr.rel (0) target = $region81
    $region80: #{tpu_custom_call.1} parent=1 // pred_region
      %560 = dma.done [#allocation4], 128
    $region81: #{tpu_custom_call.1} parent=1 // pred_fallthru
      _
    %561 = vsyncpa [#allocation3], 1
    %562 = vsyncpa [#allocation6], 1
    %563 = vsyncpa [#allocation9], 1
    %564 = vsyncpa [#allocation12], 1
    %565 = vsyncpa [#allocation4], 1

</llo_original>
